<compile_context>
chip_gen: v6e
topology: v6e:2x2x1
jax: 0.10.0
libtpu: 0.0.40
codegen_flags: <defaults>
</compile_context>

<pallas_src>
import math
import functools

import jax
import jax.numpy as jnp
import numpy as np
from jax import lax
from jax.experimental import pallas as pl
from jax.experimental.pallas import tpu as pltpu

# NOTE: the torch module hard-codes pos_weight=1.75 for the main head (bce1) and
# uses the constructor pos_weight only for the aux tasks (bce2).  Mirrored here.
MAIN_POS_WEIGHT = 1.75

_LANE = 128
_MAX_TILE = 32768                  # lanes per grid step (review: sweep 32768-65536)
_VMEM_BUDGET = 20 * 1024 * 1024    # cap on double-buffered inputs + f32 temporaries


def _pick_tile(n, k, max_tile):
    """Choose the batch-tile width (lanes per grid step) and grid layout."""
    max_tile = max(_LANE, (int(max_tile) // _LANE) * _LANE)
    # Rough bytes per batch column: 2 aux + 2 main inputs, double-buffered, counted
    # at 4 B/elem (conservative for bf16), plus ~3 live (K, NT) f32 temporaries.
    per_col = 4 * (2 * k + 2) * 2 + 12 * k
    cap = max(_LANE, (_VMEM_BUDGET // per_col) // _LANE * _LANE)
    tile = min(max_tile, cap)
    if n <= tile:
        return n, 1, None                      # single block == full batch, no mask
    nb = -(-n // tile)
    rem = (n - (nb - 1) * tile) if (n % tile) else None
    return tile, nb, rem


def _make_kernel(k_aux, nb, nt, rem, pw_aux):
    """Kernel over a (nb,) batch-tile grid.  Blocks: aux (K, nt), main (1, nt)."""
    pw_aux = float(pw_aux)

    def bce(x, y, pw):
        # BCEWithLogits(pos_weight=pw) = (1-y)*x + (1+(pw-1)*y)*softplus(-x),
        # softplus(-x) = relu(-x) + log1p(exp(-|x|)) -> one exp + one log1p.
        # v7x tuning note: these 2 transcendentals/element share the single EUP
        # slot; a bf16 exp would halve EUP occupancy at some accuracy cost.
        sp_neg = jnp.maximum(-x, 0.0) + jnp.log1p(jnp.exp(-jnp.abs(x)))
        return (1.0 - y) * x + (1.0 + (pw - 1.0) * y) * sp_neg

    def kernel(ax_ref, ay_ref, mx_ref, my_ref, aux_o_ref, main_o_ref):
        loss_a = bce(ax_ref[...].astype(jnp.float32),
                     ay_ref[...].astype(jnp.float32), pw_aux)            # (K, nt)
        loss_m = bce(mx_ref[...].astype(jnp.float32),
                     my_ref[...].astype(jnp.float32), MAIN_POS_WEIGHT)   # (1, nt)

        def write(mask_tail):
            la, lm = loss_a, loss_m
            if mask_tail:
                # Boundary tile only: columns past the (unpadded) batch end hold
                # undefined data; jnp.where (not multiply) so Inf/NaN from garbage
                # logits cannot leak into the sums.  `rem` is a static Python int.
                col_a = lax.broadcasted_iota(jnp.int32, la.shape, 1)
                la = jnp.where(col_a < rem, la, 0.0)
                col_m = lax.broadcasted_iota(jnp.int32, lm.shape, 1)
                lm = jnp.where(col_m < rem, lm, 0.0)
            aux_o_ref[...] = jnp.sum(la, axis=1, keepdims=True).reshape(1, k_aux, 1)
            main_o_ref[...] = jnp.sum(lm, axis=1, keepdims=True).reshape(1, 1, 1)

        if rem is None:            # batch divides the tile evenly: no mask anywhere
            write(False)
        else:                      # mask only the last tile; interior tiles unmasked
            b = pl.program_id(0)

            @pl.when(b == nb - 1)
            def _():
                write(True)

            @pl.when(b != nb - 1)
            def _():
                write(False)

    return kernel


def _forward(out1, out2, labels, features, w_vec, *, pw_aux, max_tile):
    """Jitted forward: light layout prep + pallas_call + scalar epilogue."""
    x1 = jnp.squeeze(out1)
    y1 = jnp.squeeze(labels)
    x2 = out2
    f2 = jnp.squeeze(features)

    if x2.ndim == 1:                          # degenerate single-sample case
        x2 = x2.reshape(1, -1)
        f2 = f2.reshape(1, -1)
        x1 = x1.reshape(1)
        y1 = y1.reshape(1)
    else:
        f2 = f2.reshape(x2.shape)
        x1 = x1.reshape(-1)
        y1 = y1.reshape(-1)

    n, k = x2.shape

    def as_float(a):                          # keep native floating dtype (bf16 OK)
        return a if jnp.issubdtype(a.dtype, jnp.floating) else a.astype(jnp.float32)

    # (K, N): task rows on sublanes, batch on the 128-wide lane axis.  The aux
    # transpose is the only remaining preprocessing pass (no concat, no padding);
    # the main head is a free (N,) -> (1, N) reshape.
    ax = as_float(x2).T
    ay = as_float(f2).T
    mx = as_float(x1).reshape(1, n)
    my = as_float(y1).reshape(1, n)

    nt, nb, rem = _pick_tile(n, k, max_tile)

    aux_sums, main_sums = pl.pallas_call(
        _make_kernel(k, nb, nt, rem, pw_aux),
        out_shape=(jax.ShapeDtypeStruct((nb, k, 1), jnp.float32),
                   jax.ShapeDtypeStruct((nb, 1, 1), jnp.float32)),
        grid_spec=pltpu.PrefetchScalarGridSpec(
            num_scalar_prefetch=0,
            grid=(nb,),
            in_specs=[
                pl.BlockSpec((k, nt), lambda b: (0, b)),
                pl.BlockSpec((k, nt), lambda b: (0, b)),
                pl.BlockSpec((1, nt), lambda b: (0, b)),
                pl.BlockSpec((1, nt), lambda b: (0, b)),
            ],
            out_specs=[
                pl.BlockSpec((1, k, 1), lambda b: (b, 0, 0)),
                pl.BlockSpec((1, 1, 1), lambda b: (b, 0, 0)),
            ],
        ),
        compiler_params=pltpu.CompilerParams(
            dimension_semantics=("parallel",),   # independent batch tiles: v7x's two
                                                 # TensorCores split the grid for free
            vmem_limit_bytes=32 * 1024 * 1024,   # safe on v5e/v6e (128 MiB) and v7x (64 MiB)
        ),
    )(ax, ay, mx, my)

    inv_n = 1.0 / jnp.float32(n)
    aux_means = jnp.sum(aux_sums[:, :, 0], axis=0) * inv_n        # (K,) aux task means
    main_mean = jnp.sum(main_sums) * inv_n                        # scalar (bce1)
    means = jnp.concatenate([aux_means, main_mean.reshape(1)])    # (K+1,)
    l_now = jnp.sum(means * w_vec.astype(jnp.float32))
    return means, l_now


class DWABceLoss:
    """JAX/Pallas port of the PyTorch DWA_bce_loss module (forward pass)."""

    def __init__(self, pos_weight, max_tile=_MAX_TILE):
        self.pos_weight = float(pos_weight)
        self._fwd = jax.jit(functools.partial(
            _forward, pw_aux=self.pos_weight, max_tile=int(max_tile)))

    def __call__(self, loss_before, outputs, labels, features):
        output1, output2 = outputs[0], outputs[1]
        task_num = (output2.shape[0] if output2.ndim == 1 else output2.shape[1]) + 1

        # DWA weights: Python scalar glue, same math as the torch module.
        weight = [1.0] * task_num
        if len(loss_before) == 2:
            r_l = [float(loss_before[-1][i]) / float(loss_before[-2][i])
                   for i in range(task_num)]
            r_l_sum = sum(math.exp(r / 0.7) for r in r_l)
            weight = [task_num * math.exp(r / 0.7) / r_l_sum for r in r_l]
            loss_before[0] = loss_before[1]

        w_vec = jnp.asarray(weight, jnp.float32)
        means, l_now = self._fwd(output1, output2, labels, features, w_vec)

        # One device->host transfer per step for the loss history consumed by the
        # Python-side DWA bookkeeping (instead of per-scalar syncs).
        all_task_loss = [float(v) for v in np.asarray(jax.device_get(means))]
        if len(loss_before) < 2:
            loss_before.append(all_task_loss)
        else:
            loss_before[1] = all_task_loss
        return l_now, loss_before


if __name__ == "__main__":
    key = jax.random.PRNGKey(0)
    k1, k2, k3, k4 = jax.random.split(key, 4)

    N, K = 8, 4                      # batch, number of auxiliary tasks
    pos_weight = 2.0                 # module "parameter"

    out1 = jax.random.normal(k1, (N, 1), dtype=jnp.float32)          # main-head logits
    out2 = jax.random.normal(k2, (N, K), dtype=jnp.float32)          # aux-head logits
    labels = (jax.random.uniform(k3, (N, 1)) > 0.5).astype(jnp.float32)
    features = (jax.random.uniform(k4, (N, K)) > 0.5).astype(jnp.float32)

    # pure-JAX reference
    def _bce(x, y, p):
        spn = jnp.maximum(-x, 0.0) + jnp.log1p(jnp.exp(-jnp.abs(x)))
        return (1.0 - y) * x + (1.0 + (p - 1.0) * y) * spn

    loss_fn = DWABceLoss(pos_weight)

    # step 1: empty history -> uniform weights
    loss_before = []
    L1, loss_before = loss_fn(loss_before, (out1, out2), labels, features)
    jax.block_until_ready(L1)

    ref_main = jnp.mean(_bce(out1.reshape(-1), labels.reshape(-1), MAIN_POS_WEIGHT))
    ref_aux = jnp.mean(_bce(out2, features, pos_weight), axis=0)
    ref_L1 = jnp.sum(ref_aux) + ref_main
    assert np.allclose(np.asarray(L1), np.asarray(ref_L1), rtol=1e-5, atol=1e-5), (
        float(L1), float(ref_L1))

    # steps 2 & 3 exercise the DWA-weighted path
    L2, loss_before = loss_fn(loss_before, (out1, out2), labels, features)
    L3, loss_before = loss_fn(loss_before, (out1, out2), labels, features)
    jax.block_until_ready(L3)

    # multi-block + ragged-tail path (tiny max_tile override exercises the
    # pl.when boundary-mask branch: 3 tiles of 128 lanes, last tile 44 valid cols)
    N2 = 300
    j1, j2, j3, j4 = jax.random.split(jax.random.PRNGKey(1), 4)
    o1 = jax.random.normal(j1, (N2, 1), dtype=jnp.float32)
    o2 = jax.random.normal(j2, (N2, K), dtype=jnp.float32)
    lb = (jax.random.uniform(j3, (N2, 1)) > 0.5).astype(jnp.float32)
    ft = (jax.random.uniform(j4, (N2, K)) > 0.5).astype(jnp.float32)
    Ls, _ = DWABceLoss(pos_weight, max_tile=128)([], (o1, o2), lb, ft)
    jax.block_until_ready(Ls)
    ref_s = (jnp.sum(jnp.mean(_bce(o2, ft, pos_weight), axis=0))
             + jnp.mean(_bce(o1.reshape(-1), lb.reshape(-1), MAIN_POS_WEIGHT)))
    assert np.allclose(np.asarray(Ls), np.asarray(ref_s), rtol=1e-5, atol=1e-5), (
        float(Ls), float(ref_s))

    print("KERNEL_OK")
</pallas_src>

<mosaic_0001>
module attributes {stable_mosaic.version = 11 : i64} {
  func.func @kernel(%arg0: i32, %arg1: memref<4x8xf32, #tpu.memory_space<vmem>>, %arg2: memref<4x8xf32, #tpu.memory_space<vmem>>, %arg3: memref<1x8xf32, #tpu.memory_space<vmem>>, %arg4: memref<1x8xf32, #tpu.memory_space<vmem>>, %arg5: memref<1x4x1xf32, #tpu.memory_space<vmem>>, %arg6: memref<1x1x1xf32, #tpu.memory_space<vmem>>) attributes {dimension_semantics = [#tpu.dimension_semantics<parallel>], iteration_bounds = array<i64: 1>, scalar_prefetch = 0 : i64, scratch_operands = 0 : i64, tpu.core_type = #tpu.core_type<tc>, window_params = [{transform_indices = @transform_0, window_bounds = array<i64: 4, 8>}, {transform_indices = @transform_1, window_bounds = array<i64: 4, 8>}, {transform_indices = @transform_2, window_bounds = array<i64: 1, 8>}, {transform_indices = @transform_3, window_bounds = array<i64: 1, 8>}, {transform_indices = @transform_4, window_bounds = array<i64: 1, 4, 1>}, {transform_indices = @transform_5, window_bounds = array<i64: 1, 1, 1>}]} {
    %c0 = arith.constant 0 : index
    %c0_0 = arith.constant 0 : index
    %0 = vector.load %arg1[%c0, %c0_0] : memref<4x8xf32, #tpu.memory_space<vmem>>, vector<4x8xf32>
    %c0_1 = arith.constant 0 : index
    %c0_2 = arith.constant 0 : index
    %1 = vector.load %arg2[%c0_1, %c0_2] : memref<4x8xf32, #tpu.memory_space<vmem>>, vector<4x8xf32>
    %cst = arith.constant 0.000000e+00 : f32
    %2 = vector.broadcast %cst : f32 to vector<4x8xf32>
    %3 = arith.subf %2, %0 : vector<4x8xf32>
    %cst_3 = arith.constant 0.000000e+00 : f32
    %4 = vector.broadcast %cst_3 : f32 to vector<4x8xf32>
    %5 = arith.maximumf %3, %4 : vector<4x8xf32>
    %6 = math.absf %0 : vector<4x8xf32>
    %cst_4 = arith.constant 0.000000e+00 : f32
    %7 = vector.broadcast %cst_4 : f32 to vector<4x8xf32>
    %8 = arith.subf %7, %6 : vector<4x8xf32>
    %9 = math.exp %8 : vector<4x8xf32>
    %10 = math.log1p %9 : vector<4x8xf32>
    %11 = arith.addf %5, %10 : vector<4x8xf32>
    %cst_5 = arith.constant 1.000000e+00 : f32
    %12 = vector.broadcast %cst_5 : f32 to vector<4x8xf32>
    %13 = arith.subf %12, %1 : vector<4x8xf32>
    %14 = arith.mulf %13, %0 : vector<4x8xf32>
    %cst_6 = arith.constant 1.000000e+00 : f32
    %15 = vector.broadcast %cst_6 : f32 to vector<4x8xf32>
    %16 = arith.mulf %15, %1 : vector<4x8xf32>
    %cst_7 = arith.constant 1.000000e+00 : f32
    %17 = vector.broadcast %cst_7 : f32 to vector<4x8xf32>
    %18 = arith.addf %17, %16 : vector<4x8xf32>
    %19 = arith.mulf %18, %11 : vector<4x8xf32>
    %20 = arith.addf %14, %19 : vector<4x8xf32>
    %c0_8 = arith.constant 0 : index
    %c0_9 = arith.constant 0 : index
    %21 = vector.load %arg3[%c0_8, %c0_9] : memref<1x8xf32, #tpu.memory_space<vmem>>, vector<1x8xf32>
    %c0_10 = arith.constant 0 : index
    %c0_11 = arith.constant 0 : index
    %22 = vector.load %arg4[%c0_10, %c0_11] : memref<1x8xf32, #tpu.memory_space<vmem>>, vector<1x8xf32>
    %cst_12 = arith.constant 0.000000e+00 : f32
    %23 = vector.broadcast %cst_12 : f32 to vector<1x8xf32>
    %24 = arith.subf %23, %21 : vector<1x8xf32>
    %cst_13 = arith.constant 0.000000e+00 : f32
    %25 = vector.broadcast %cst_13 : f32 to vector<1x8xf32>
    %26 = arith.maximumf %24, %25 : vector<1x8xf32>
    %27 = math.absf %21 : vector<1x8xf32>
    %cst_14 = arith.constant 0.000000e+00 : f32
    %28 = vector.broadcast %cst_14 : f32 to vector<1x8xf32>
    %29 = arith.subf %28, %27 : vector<1x8xf32>
    %30 = math.exp %29 : vector<1x8xf32>
    %31 = math.log1p %30 : vector<1x8xf32>
    %32 = arith.addf %26, %31 : vector<1x8xf32>
    %cst_15 = arith.constant 1.000000e+00 : f32
    %33 = vector.broadcast %cst_15 : f32 to vector<1x8xf32>
    %34 = arith.subf %33, %22 : vector<1x8xf32>
    %35 = arith.mulf %34, %21 : vector<1x8xf32>
    %cst_16 = arith.constant 7.500000e-01 : f32
    %36 = vector.broadcast %cst_16 : f32 to vector<1x8xf32>
    %37 = arith.mulf %36, %22 : vector<1x8xf32>
    %cst_17 = arith.constant 1.000000e+00 : f32
    %38 = vector.broadcast %cst_17 : f32 to vector<1x8xf32>
    %39 = arith.addf %38, %37 : vector<1x8xf32>
    %40 = arith.mulf %39, %32 : vector<1x8xf32>
    %41 = arith.addf %35, %40 : vector<1x8xf32>
    %cst_18 = arith.constant dense<0.000000e+00> : vector<4xf32>
    %42 = vector.multi_reduction <add>, %20, %cst_18 [1] : vector<4x8xf32> to vector<4xf32>
    %43 = vector.shape_cast %42 : vector<4xf32> to vector<4x1xf32>
    %44 = vector.shape_cast %43 : vector<4x1xf32> to vector<1x4x1xf32>
    %c0_19 = arith.constant 0 : index
    %c0_20 = arith.constant 0 : index
    %c0_21 = arith.constant 0 : index
    %45 = vector.load %arg5[%c0_19, %c0_20, %c0_21] : memref<1x4x1xf32, #tpu.memory_space<vmem>>, vector<1x4x1xf32>
    tpu.vector_store %arg5[%c0_19, %c0_20, %c0_21], %44 {strides = array<i32>} : memref<1x4x1xf32, #tpu.memory_space<vmem>>, vector<1x4x1xf32>,
    %cst_22 = arith.constant dense<0.000000e+00> : vector<1xf32>
    %46 = vector.multi_reduction <add>, %41, %cst_22 [1] : vector<1x8xf32> to vector<1xf32>
    %47 = vector.shape_cast %46 : vector<1xf32> to vector<1x1xf32>
    %48 = vector.shape_cast %47 : vector<1x1xf32> to vector<1x1x1xf32>
    %c0_23 = arith.constant 0 : index
    %c0_24 = arith.constant 0 : index
    %c0_25 = arith.constant 0 : index
    %49 = vector.load %arg6[%c0_23, %c0_24, %c0_25] : memref<1x1x1xf32, #tpu.memory_space<vmem>>, vector<1x1x1xf32>
    tpu.vector_store %arg6[%c0_23, %c0_24, %c0_25], %48 {strides = array<i32>} : memref<1x1x1xf32, #tpu.memory_space<vmem>>, vector<1x1x1xf32>,
    return
  }
  func.func @transform_0(%arg0: i32) -> (i32, i32) {
    %c0_i32 = arith.constant 0 : i32
    %c0_i32_0 = arith.constant 0 : i32
    return %c0_i32, %arg0 : i32, i32
  }
  func.func @transform_1(%arg0: i32) -> (i32, i32) {
    %c0_i32 = arith.constant 0 : i32
    %c0_i32_0 = arith.constant 0 : i32
    return %c0_i32, %arg0 : i32, i32
  }
  func.func @transform_2(%arg0: i32) -> (i32, i32) {
    %c0_i32 = arith.constant 0 : i32
    %c0_i32_0 = arith.constant 0 : i32
    return %c0_i32, %arg0 : i32, i32
  }
  func.func @transform_3(%arg0: i32) -> (i32, i32) {
    %c0_i32 = arith.constant 0 : i32
    %c0_i32_0 = arith.constant 0 : i32
    return %c0_i32, %arg0 : i32, i32
  }
  func.func @transform_4(%arg0: i32) -> (i32, i32, i32) {
    %c0_i32 = arith.constant 0 : i32
    %c0_i32_0 = arith.constant 0 : i32
    %c0_i32_1 = arith.constant 0 : i32
    return %arg0, %c0_i32, %c0_i32_0 : i32, i32, i32
  }
  func.func @transform_5(%arg0: i32) -> (i32, i32, i32) {
    %c0_i32 = arith.constant 0 : i32
    %c0_i32_0 = arith.constant 0 : i32
    %c0_i32_1 = arith.constant 0 : i32
    return %arg0, %c0_i32, %c0_i32_0 : i32, i32, i32
  }
}

</mosaic_0001>

<llo_original>
// kernel: _forward.1
$region0: #{_forward.1}
  #allocation0 [shape = 'u32[]', space=smem, size = 0x4, offset = 0x4, fixed_abs, tag = 'smem constant byte address 0x4 - core index']
  #allocation1 [shape = 'u32[144,128]{1,0:T(1,128)}', space=vmem, size = 0x12000, scoped, tag = 'internal scratch']
  %s0 = inlined_call_operand.vmem [shape: f32[4,8], index: 0, kind: input, shape index: {}]
  %s1 = inlined_call_operand.vmem [shape: f32[4,8], index: 1, kind: input, shape index: {}]
  %s2 = inlined_call_operand.vmem [shape: f32[1,8], index: 2, kind: input, shape index: {}]
  %s3 = inlined_call_operand.vmem [shape: f32[1,8], index: 3, kind: input, shape index: {}]
  %s4 = inlined_call_operand.vmem [shape: f32[1,4,1], index: 4, kind: output, shape index: {0}]
  %s5 = inlined_call_operand.hbm [shape: f32[1,1,1], index: 5, kind: output, shape index: {1}]
  %6 = xla_tuple %s4, %s5
  %s7 = sld [smem:[#allocation0]]
  $region34: #{_forward.1} parent=0
    _
  %s9 = ssub.s32 1, %s7
  %s10 = scalar_select 0, %s9, %s7
  $region1: #{_forward.1} parent=0
    #allocation2 [shape = 'u8[512]{0}', space=vmem, size = 0x400, scoped, tag = 'output window, operand 1, single buffered']
    #allocation3 [shape = 's32[1]{0}', space=sflag, size = 0x4, scoped, tag = 'scoped memory for _forward.1']
    %11 = vsyncpa [#allocation3], 0
    // Predicated region
    $region2: #{_forward.1} parent=1 // pred_check
      _
    $region3: #{_forward.1} parent=1 // pred_check_branch
      %13 = sbr.rel (0) target = $region5
    $region4: #{_forward.1} parent=1 // pred_region
      _
    $region5: #{_forward.1} parent=1 // pred_fallthru
      _
    // Predicated region
    $region6: #{_forward.1} parent=1 // pred_check
      _
    $region7: #{_forward.1} parent=1 // pred_check_branch
      %15 = sbr.rel (0) target = $region9
    $region8: #{_forward.1} parent=1 // pred_region
      _
    $region9: #{_forward.1} parent=1 // pred_fallthru
      _
    // Predicated region
    $region10: #{_forward.1} parent=1 // pred_check
      _
    $region11: #{_forward.1} parent=1 // pred_check_branch
      %17 = sbr.rel (0) target = $region13
    $region12: #{_forward.1} parent=1 // pred_region
      _
    $region13: #{_forward.1} parent=1 // pred_fallthru
      _
    // Predicated region
    $region14: #{_forward.1} parent=1 // pred_check
      _
    $region15: #{_forward.1} parent=1 // pred_check_branch
      %19 = sbr.rel (0) target = $region17
    $region16: #{_forward.1} parent=1 // pred_region
      _
    $region17: #{_forward.1} parent=1 // pred_fallthru
      _
    %v20 = vld [vmem:[%s0] sm:$0xf]
    %v21 = vld [vmem:[%s1] sm:$0xf]
    %v22 = vsub.f32 0.0, %v20
    %v23 = vmax.f32 %v22, 0.0
    %v24 = vand.u32 2147483647, %v20
    %v25 = vsub.f32 0.0, %v24
    %v26 = vmul.f32 %v25, 1.442695
    %v27 = vpow.pop %v26
    %v28 = vadd.f32 %v27, 1.0
    %v29 = vlog2.pop %v28
    %v30 = vmul.f32 %v29, 0.6931472
    %v31 = vmul.f32 -0.5, %v27
    %v32 = vadd.f32 %v31, 1.0
    %v33 = vmul.f32 %v32, %v27
    %v34 = vand.u32 2147483647, %v27
    %vm35 = vcmp.lt.f32.partialorder %v34, 0.0004427343
    %v36 = vsel %vm35, %v33, %v30
    %v37 = vadd.f32 %v23, %v36
    %v38 = vsub.f32 1.0, %v21
    %v39 = vmul.f32 %v38, %v20
    %v40 = vadd.f32 %v21, 1.0
    %v41 = vmul.f32 %v40, %v37
    %v42 = vadd.f32 %v39, %v41
    %v43 = vld [vmem:[%s2] sm:$0x1]
    %v44 = vld [vmem:[%s3] sm:$0x1]
    %v45 = vsub.f32 0.0, %v43
    %v46 = vmax.f32 %v45, 0.0
    %v47 = vand.u32 2147483647, %v43
    %v48 = vsub.f32 0.0, %v47
    %v49 = vmul.f32 %v48, 1.442695
    %v50 = vpow.pop %v49
    %v51 = vadd.f32 %v50, 1.0
    %v52 = vlog2.pop %v51
    %v53 = vmul.f32 %v52, 0.6931472
    %v54 = vmul.f32 -0.5, %v50
    %v55 = vadd.f32 %v54, 1.0
    %v56 = vmul.f32 %v55, %v50
    %v57 = vand.u32 2147483647, %v50
    %vm58 = vcmp.lt.f32.partialorder %v57, 0.0004427343
    %v59 = vsel %vm58, %v56, %v53
    %v60 = vadd.f32 %v46, %v59
    %v61 = vsub.f32 1.0, %v44
    %v62 = vmul.f32 %v61, %v43
    %v63 = vmul.f32 %v44, 0.75
    %v64 = vadd.f32 %v63, 1.0
    %v65 = vmul.f32 %v64, %v60
    %v66 = vadd.f32 %v62, %v65
    %vm67 = vcmask 60416
    %v68 = vsel %vm67, %v42, 0.0
    %69 = vadd.xlane.f32.xlu0 %v68
    %v70 = vpop.xlane.xlu0 %69
    %vm71 = vcmask 3072
    %72 = vst.msk [vmem:[%s4] sm:$0xf] %vm71, %v70
    %vm73 = vcmask 57344
    %v74 = vsel %vm73, %v66, 0.0
    %75 = vadd.xlane.f32.xlu0 %v74
    %v76 = vpop.xlane.xlu0 %75
    %vm77 = vcmask 0
    %78 = vst.msk [vmem:[#allocation2] sm:$0x1] %vm77, %v76
    // Predicated region
    $region18: #{_forward.1} parent=1 // pred_check
      _
    $region19: #{_forward.1} parent=1 // pred_check_branch
      %80 = sbr.rel (0) target = $region21
    $region20: #{_forward.1} parent=1 // pred_region
      _
    $region21: #{_forward.1} parent=1 // pred_fallthru
      _
    // Predicated region
    $region22: #{_forward.1} parent=1 // pred_check
      _
    $region23: #{_forward.1} parent=1 // pred_check_branch
      %82 = sbr.rel (0) target = $region25
    $region24: #{_forward.1} parent=1 // pred_region
      %s84 = ssub.s32 16, 16
      %85 = vsyncadd [#allocation3], %s84
      %s87 = sshll.u32 [#allocation2], 4
      %s88 = int_to_ptr.vmem [resolvable:$true] %s87
      %90 = dma.vmem_to_hbm [thread:$0]  %s88, 16, %s5, [#allocation3]
    $region25: #{_forward.1} parent=1 // pred_fallthru
      _
    // Predicated region
    $region26: #{_forward.1} parent=1 // pred_check
      _
    $region27: #{_forward.1} parent=1 // pred_check_branch
      %92 = sbr.rel (0) target = $region29
    $region28: #{_forward.1} parent=1 // pred_region
      _
    $region29: #{_forward.1} parent=1 // pred_fallthru
      _
    // Predicated region
    $region30: #{_forward.1} parent=1 // pred_check
      _
    $region31: #{_forward.1} parent=1 // pred_check_branch
      %94 = sbr.rel (0) target = $region33
    $region32: #{_forward.1} parent=1 // pred_region
      %95 = dma.done [#allocation3], 16
    $region33: #{_forward.1} parent=1 // pred_fallthru
      _
    %96 = vsyncpa [#allocation3], 1

</llo_original>
